<compile_context>
chip_gen: v7x
topology: tpu7x:2x2x1
jax: 0.10.0
libtpu: 0.0.40
codegen_flags: <defaults>
</compile_context>

<pallas_src>
import functools

import jax
import jax.numpy as jnp
import numpy as np
from jax.experimental import pallas as pl
from jax.experimental.pallas import tpu as pltpu


def _embedding_vmem_kernel(ids_ref, table_ref, out_ref, *, block_n):
    """Small-table fast path: gather rows from a VMEM-resident table.

    ids_ref   : (N_padded,) int32 in SMEM (scalar-prefetched token ids)
    table_ref : (V, Dp) full embedding table, VMEM-resident (constant block)
    out_ref   : (block_n, Dp) output block in VMEM
    """
    base = pl.program_id(0) * block_n
    for j in range(block_n):                      # static unroll
        tok = ids_ref[base + j]
        out_ref[pl.ds(j, 1), :] = table_ref[pl.ds(tok, 1), :]


def _embedding_hbm_kernel(ids_ref, emb_hbm, out_ref, sem, *, block_n):
    """Large-table path: per-row HBM DMAs written straight into the out block.

    ids_ref : (N_padded,) int32 in SMEM
    emb_hbm : (V, Dp) embedding table ref left in HBM (memory_space=pl.ANY)
    out_ref : (block_n, Dp) output block in VMEM — direct DMA target (no
              staging buffer, no VMEM->VMEM slab copy)
    sem     : single shared DMA semaphore
    """
    base = pl.program_id(0) * block_n
    # Issue all row DMAs back-to-back so their HBM latencies overlap.
    for j in range(block_n):
        tok = ids_ref[base + j]
        pltpu.make_async_copy(emb_hbm.at[pl.ds(tok, 1), :],
                              out_ref.at[pl.ds(j, 1), :],
                              sem).start()
    # All copies are in flight and have identical size -> drain the shared
    # semaphore once per issued copy (descriptor re-created at wait time).
    for j in range(block_n):
        pltpu.make_async_copy(emb_hbm.at[pl.ds(0, 1), :],
                              out_ref.at[pl.ds(j, 1), :],
                              sem).wait()


def _round_up(x, m):
    return ((x + m - 1) // m) * m


def word_embedding(ids, weights, *, block_n=128, vmem_budget_bytes=None):
    """nn.Embedding forward: returns weights[ids] with shape ids.shape + (D,)."""
    V, D = weights.shape
    lead_shape = ids.shape

    flat = jnp.asarray(ids, jnp.int32).reshape(-1)
    flat = jnp.clip(flat, 0, V - 1)               # never DMA/load out of bounds
    n = flat.shape[0]

    # Lane-dense output: pad embedding dim to a multiple of 128 so the
    # (block_n, Dp) writeback uses full vst's instead of masked partial stores.
    Dp = _round_up(D, 128)
    w = weights if Dp == D else jnp.pad(weights, ((0, 0), (0, Dp - D)))

    block_n = max(8, min(_round_up(block_n, 8), _round_up(n, 8)))
    n_padded = _round_up(n, block_n)
    if n_padded != n:                             # tail slots gather row 0, sliced off below
        flat = jnp.pad(flat, (0, n_padded - n))

    itemsize = jnp.dtype(w.dtype).itemsize
    table_bytes = V * Dp * itemsize
    out_block_bytes = block_n * Dp * itemsize

    # Conservative per-core VMEM budget (safe on v7x: 64 MiB physical / ~32 MiB
    # default-scoped, table counted twice because BlockSpec inputs are
    # double-buffered; also fits comfortably on v5e/v6e).
    if vmem_budget_bytes is None:
        vmem_budget_bytes = 24 * 1024 * 1024
    resident_need = 2 * table_bytes + 2 * out_block_bytes + (1 << 20)
    use_resident = resident_need <= vmem_budget_bytes

    grid = (n_padded // block_n,)
    out_spec = pl.BlockSpec((block_n, Dp), lambda i, ids_ref: (i, 0))
    out_shape = jax.ShapeDtypeStruct((n_padded, Dp), w.dtype)

    if use_resident:
        need = resident_need
        kernel = functools.partial(_embedding_vmem_kernel, block_n=block_n)
        grid_spec = pltpu.PrefetchScalarGridSpec(
            num_scalar_prefetch=1,                 # flat ids -> SMEM
            grid=grid,
            # Constant block index -> table fetched once per core, stays resident.
            in_specs=[pl.BlockSpec((V, Dp), lambda i, ids_ref: (0, 0))],
            out_specs=out_spec,
        )
    else:
        need = 2 * out_block_bytes + (2 << 20)
        kernel = functools.partial(_embedding_hbm_kernel, block_n=block_n)
        grid_spec = pltpu.PrefetchScalarGridSpec(
            num_scalar_prefetch=1,                 # flat ids -> SMEM
            grid=grid,
            in_specs=[pl.BlockSpec(memory_space=pl.ANY)],   # table stays in HBM
            out_specs=out_spec,
            scratch_shapes=[pltpu.SemaphoreType.DMA],       # one shared DMA sem
        )

    vmem_limit = int(min(max(need + (4 << 20), 16 << 20), 30 << 20))

    out = pl.pallas_call(
        kernel,
        out_shape=out_shape,
        grid_spec=grid_spec,
        compiler_params=pltpu.CompilerParams(
            dimension_semantics=("parallel",),     # independent blocks -> megacore-shardable
            vmem_limit_bytes=vmem_limit),
    )(flat, w)

    out = out[:n, :D]
    return out.reshape(*lead_shape, D)


def init_embedding(key, vocab_size, embedding_dim, padding_idx=None):
    """Mirror nn.Embedding init: N(0,1) weights, padding row zeroed."""
    w = jax.random.normal(key, (vocab_size, embedding_dim), jnp.float32)
    if padding_idx is not None:
        w = w.at[padding_idx].set(0.0)
    return w


if __name__ == "__main__":
    key = jax.random.PRNGKey(0)
    k_ids, k_w = jax.random.split(key)

    B, S = 2, 8
    vocab_size, embedding_dim, padding_idx = 512, 128, 0

    weights = init_embedding(k_w, vocab_size, embedding_dim, padding_idx)
    ids = jax.random.randint(k_ids, (B, S), 0, vocab_size, dtype=jnp.int32)
    ids = ids.at[0, -1].set(padding_idx)           # include a padding token

    ref = weights[ids]                             # pure-JAX reference (exact gather)

    # Fast path: the 256 KiB demo table is VMEM-resident; N=16 tokens -> 2 grid
    # blocks so both TensorCores get work on v7x.
    out_fast = jax.block_until_ready(word_embedding(ids, weights, block_n=8))
    np.testing.assert_allclose(np.asarray(out_fast), np.asarray(ref), rtol=0, atol=0)
    assert out_fast.shape == (B, S, embedding_dim)

    # Large-table fallback: force the HBM row-gather path (rows DMA'd straight
    # into the output block via a single shared DMA semaphore).
    out_hbm = jax.block_until_ready(
        word_embedding(ids, weights, block_n=8, vmem_budget_bytes=0))
    np.testing.assert_allclose(np.asarray(out_hbm), np.asarray(ref), rtol=0, atol=0)

    print("KERNEL_OK")
</pallas_src>

<mosaic_0001>
module attributes {stable_mosaic.version = 11 : i64} {
  func.func @_embedding_vmem_kernel(%arg0: i32, %arg1: memref<16xi32, #tpu.memory_space<smem>>, %arg2: memref<512x128xf32, #tpu.memory_space<vmem>>, %arg3: memref<8x128xf32, #tpu.memory_space<vmem>>) attributes {dimension_semantics = [#tpu.dimension_semantics<parallel>], iteration_bounds = array<i64: 2>, scalar_prefetch = 1 : i64, scratch_operands = 0 : i64, tpu.core_type = #tpu.core_type<tc>, window_params = [{pipeline_mode = #tpu.pipeline_mode<synchronous>, transform_indices = @transform_0, window_bounds = array<i64: 512, 128>}, {transform_indices = @transform_1, window_bounds = array<i64: 8, 128>}]} {
    %c8_i32 = arith.constant 8 : i32
    %0 = arith.muli %arg0, %c8_i32 : i32
    %c0_i32 = arith.constant 0 : i32
    %1 = arith.addi %0, %c0_i32 : i32
    %2 = arith.index_cast %1 : i32 to index
    %3 = memref.load %arg1[%2] : memref<16xi32, #tpu.memory_space<smem>>
    %4 = arith.index_cast %3 : i32 to index
    %c0 = arith.constant 0 : index
    %5 = vector.load %arg2[%4, %c0] : memref<512x128xf32, #tpu.memory_space<vmem>>, vector<1x128xf32>
    %c0_0 = arith.constant 0 : index
    %c0_1 = arith.constant 0 : index
    %6 = vector.load %arg3[%c0_0, %c0_1] : memref<8x128xf32, #tpu.memory_space<vmem>>, vector<1x128xf32>
    tpu.vector_store %arg3[%c0_0, %c0_1], %5 {strides = array<i32>} : memref<8x128xf32, #tpu.memory_space<vmem>>, vector<1x128xf32>,
    %c1_i32 = arith.constant 1 : i32
    %7 = arith.addi %0, %c1_i32 : i32
    %8 = arith.index_cast %7 : i32 to index
    %9 = memref.load %arg1[%8] : memref<16xi32, #tpu.memory_space<smem>>
    %10 = arith.index_cast %9 : i32 to index
    %c0_2 = arith.constant 0 : index
    %11 = vector.load %arg2[%10, %c0_2] : memref<512x128xf32, #tpu.memory_space<vmem>>, vector<1x128xf32>
    %c1 = arith.constant 1 : index
    %c0_3 = arith.constant 0 : index
    %12 = vector.load %arg3[%c1, %c0_3] : memref<8x128xf32, #tpu.memory_space<vmem>>, vector<1x128xf32>
    tpu.vector_store %arg3[%c1, %c0_3], %11 {strides = array<i32>} : memref<8x128xf32, #tpu.memory_space<vmem>>, vector<1x128xf32>,
    %c2_i32 = arith.constant 2 : i32
    %13 = arith.addi %0, %c2_i32 : i32
    %14 = arith.index_cast %13 : i32 to index
    %15 = memref.load %arg1[%14] : memref<16xi32, #tpu.memory_space<smem>>
    %16 = arith.index_cast %15 : i32 to index
    %c0_4 = arith.constant 0 : index
    %17 = vector.load %arg2[%16, %c0_4] : memref<512x128xf32, #tpu.memory_space<vmem>>, vector<1x128xf32>
    %c2 = arith.constant 2 : index
    %c0_5 = arith.constant 0 : index
    %18 = vector.load %arg3[%c2, %c0_5] : memref<8x128xf32, #tpu.memory_space<vmem>>, vector<1x128xf32>
    tpu.vector_store %arg3[%c2, %c0_5], %17 {strides = array<i32>} : memref<8x128xf32, #tpu.memory_space<vmem>>, vector<1x128xf32>,
    %c3_i32 = arith.constant 3 : i32
    %19 = arith.addi %0, %c3_i32 : i32
    %20 = arith.index_cast %19 : i32 to index
    %21 = memref.load %arg1[%20] : memref<16xi32, #tpu.memory_space<smem>>
    %22 = arith.index_cast %21 : i32 to index
    %c0_6 = arith.constant 0 : index
    %23 = vector.load %arg2[%22, %c0_6] : memref<512x128xf32, #tpu.memory_space<vmem>>, vector<1x128xf32>
    %c3 = arith.constant 3 : index
    %c0_7 = arith.constant 0 : index
    %24 = vector.load %arg3[%c3, %c0_7] : memref<8x128xf32, #tpu.memory_space<vmem>>, vector<1x128xf32>
    tpu.vector_store %arg3[%c3, %c0_7], %23 {strides = array<i32>} : memref<8x128xf32, #tpu.memory_space<vmem>>, vector<1x128xf32>,
    %c4_i32 = arith.constant 4 : i32
    %25 = arith.addi %0, %c4_i32 : i32
    %26 = arith.index_cast %25 : i32 to index
    %27 = memref.load %arg1[%26] : memref<16xi32, #tpu.memory_space<smem>>
    %28 = arith.index_cast %27 : i32 to index
    %c0_8 = arith.constant 0 : index
    %29 = vector.load %arg2[%28, %c0_8] : memref<512x128xf32, #tpu.memory_space<vmem>>, vector<1x128xf32>
    %c4 = arith.constant 4 : index
    %c0_9 = arith.constant 0 : index
    %30 = vector.load %arg3[%c4, %c0_9] : memref<8x128xf32, #tpu.memory_space<vmem>>, vector<1x128xf32>
    tpu.vector_store %arg3[%c4, %c0_9], %29 {strides = array<i32>} : memref<8x128xf32, #tpu.memory_space<vmem>>, vector<1x128xf32>,
    %c5_i32 = arith.constant 5 : i32
    %31 = arith.addi %0, %c5_i32 : i32
    %32 = arith.index_cast %31 : i32 to index
    %33 = memref.load %arg1[%32] : memref<16xi32, #tpu.memory_space<smem>>
    %34 = arith.index_cast %33 : i32 to index
    %c0_10 = arith.constant 0 : index
    %35 = vector.load %arg2[%34, %c0_10] : memref<512x128xf32, #tpu.memory_space<vmem>>, vector<1x128xf32>
    %c5 = arith.constant 5 : index
    %c0_11 = arith.constant 0 : index
    %36 = vector.load %arg3[%c5, %c0_11] : memref<8x128xf32, #tpu.memory_space<vmem>>, vector<1x128xf32>
    tpu.vector_store %arg3[%c5, %c0_11], %35 {strides = array<i32>} : memref<8x128xf32, #tpu.memory_space<vmem>>, vector<1x128xf32>,
    %c6_i32 = arith.constant 6 : i32
    %37 = arith.addi %0, %c6_i32 : i32
    %38 = arith.index_cast %37 : i32 to index
    %39 = memref.load %arg1[%38] : memref<16xi32, #tpu.memory_space<smem>>
    %40 = arith.index_cast %39 : i32 to index
    %c0_12 = arith.constant 0 : index
    %41 = vector.load %arg2[%40, %c0_12] : memref<512x128xf32, #tpu.memory_space<vmem>>, vector<1x128xf32>
    %c6 = arith.constant 6 : index
    %c0_13 = arith.constant 0 : index
    %42 = vector.load %arg3[%c6, %c0_13] : memref<8x128xf32, #tpu.memory_space<vmem>>, vector<1x128xf32>
    tpu.vector_store %arg3[%c6, %c0_13], %41 {strides = array<i32>} : memref<8x128xf32, #tpu.memory_space<vmem>>, vector<1x128xf32>,
    %c7_i32 = arith.constant 7 : i32
    %43 = arith.addi %0, %c7_i32 : i32
    %44 = arith.index_cast %43 : i32 to index
    %45 = memref.load %arg1[%44] : memref<16xi32, #tpu.memory_space<smem>>
    %46 = arith.index_cast %45 : i32 to index
    %c0_14 = arith.constant 0 : index
    %47 = vector.load %arg2[%46, %c0_14] : memref<512x128xf32, #tpu.memory_space<vmem>>, vector<1x128xf32>
    %c7 = arith.constant 7 : index
    %c0_15 = arith.constant 0 : index
    %48 = vector.load %arg3[%c7, %c0_15] : memref<8x128xf32, #tpu.memory_space<vmem>>, vector<1x128xf32>
    tpu.vector_store %arg3[%c7, %c0_15], %47 {strides = array<i32>} : memref<8x128xf32, #tpu.memory_space<vmem>>, vector<1x128xf32>,
    return
  }
  func.func @transform_0(%arg0: i32, %arg1: memref<16xi32, #tpu.memory_space<smem>>) -> (i32, i32) {
    %c0_i32 = arith.constant 0 : i32
    %c0_i32_0 = arith.constant 0 : i32
    %c0_i32_1 = arith.constant 0 : i32
    return %c0_i32, %c0_i32_0 : i32, i32
  }
  func.func @transform_1(%arg0: i32, %arg1: memref<16xi32, #tpu.memory_space<smem>>) -> (i32, i32) {
    %c0_i32 = arith.constant 0 : i32
    %c0_i32_0 = arith.constant 0 : i32
    return %arg0, %c0_i32 : i32, i32
  }
}

</mosaic_0001>

<llo_original>
// kernel: tpu_custom_call.1
$region0: #{tpu_custom_call.1}
  #allocation0 [shape = 'u32[]', space=smem, size = 0x4, offset = 0x4, fixed_abs, tag = 'smem constant byte address 0x4 - core index']
  #allocation1 [shape = 'u32[144,128]{1,0:T(1,128)}', space=vmem, size = 0x12000, scoped, tag = 'internal scratch']
  #allocation2 [shape = 's32[1]{0}', space=sflag, size = 0x4, scoped, tag = 'scoped memory for tpu_custom_call.1']
  #allocation3 [shape = 'u8[512]{0}', space=smem, size = 0x200, scoped, tag = 'prefetched SMEM operand 0']
  %s0 = inlined_call_operand.hbm [shape: s32[16], index: 0, kind: input, shape index: {}]
  %s1 = inlined_call_operand.hbm [shape: f32[512,128], index: 1, kind: input, shape index: {}]
  %s2 = inlined_call_operand.hbm [shape: f32[16,128], index: 2, kind: output, shape index: {}]
  %s3 = sld [smem:[#allocation0]]
  $region41: #{tpu_custom_call.1} parent=0
    _
  %s5 = ssub.s32 1, %s3
  %s6 = scalar_select 0, %s5, %s3
  %8 = dma.hbm_to_smem %s0, 16, [#allocation3], [#allocation2]
  %9 = dma.done [#allocation2], 16
  %10 = sfence
  $region1: #{tpu_custom_call.1} parent=0
    #allocation4 [shape = 'u8[262144]{0}', space=vmem, size = 0x40000, scoped, tag = 'input window, operand 1, single buffered']
    #allocation5 [shape = 's32[2]{0}', space=sflag, size = 0x8, scoped, tag = 'scoped memory for tpu_custom_call.1']
    #allocation6 [shape = 's32[2]{0}', space=sflag, size = 0x8, scoped, tag = 'scoped memory for tpu_custom_call.1']
    #allocation7 [shape = 'u8[8192]{0}', space=vmem, size = 0x2000, scoped, tag = 'output window, operand 0']
    %11 = vsyncpa [#allocation5], 0
    %12 = vsyncpa [#allocation6], 0
    %s13 = scalar_lea.sflag [#allocation6], 1
    %14 = vsyncpa %s13, 0
    loop: start=0, step=1, limit=4
    $region2: #{tpu_custom_call.1} parent=1 // loop_pre_header
      _
    $region3: #{tpu_custom_call.1} parent=1 // loop_header
      %s16 = sphi 0, %s20
      %p17 = scmp.ge.s32.totalorder %s16, 4
      %s24 = sphi 0, %s24
      %s26 = sphi 0, %s24
      %s27 = sphi 0, %s26
      %s41 = sphi 0, %s27
      %s47 = sphi 0, %s49
      %s50 = sphi 0, %s47
      %s51 = sphi 0, %s50
      %s67 = sphi 0, %s51
    $region4: #{tpu_custom_call.1} parent=1 // loop_header_branch
      %19 = sbr.rel (%p17) target = $region8
    $region5: #{tpu_custom_call.1} parent=1 // loop_body
      %s21 = ssub.s32 %s16, 1
      %s22 = ssub.s32 %s16, 2
      %s23 = sadd.s32 %s16, 1
      %s25 = sadd.s32 %s24, 1
      %p28 = scmp.eq.s32.totalorder %s16, 1
      %p29 = scmp.ne.s32.totalorder %s24, %s26
      %p30 = scmp.eq.s32.totalorder %s16, 0
      %p31 = por %p29, %p30
      %p32 = scmp.ne.s32.totalorder %s24, %s26
      %p33 = scmp.eq.s32.totalorder %s21, 1
      %p34 = por %p32, %p33
      %p35 = scmp.ne.s32.totalorder %s26, %s27
      %p36 = scmp.eq.s32.totalorder %s21, 0
      %p37 = por %p35, %p36
      %p38 = scmp.ne.s32.totalorder %s26, %s27
      %p39 = scmp.eq.s32.totalorder %s22, 1
      %p40 = por %p38, %p39
      %p42 = scmp.ne.s32.totalorder %s27, %s41
      %p43 = scmp.eq.s32.totalorder %s22, 0
      %p44 = por %p42, %p43
      %s45 = ssub.s32 %s16, %s23
      %p46 = scmp.eq.s32.totalorder %s45, 0
      %s48 = sadd.s32 %s47, 1
      %s49 = scalar_select %p46, %s47, %s48
      %p52 = pneg %p46
      %p53 = scmp.eq.s32.totalorder %s16, 1
      %p54 = por %p52, %p53
      %p55 = scmp.ne.s32.totalorder %s47, %s50
      %p56 = scmp.eq.s32.totalorder %s16, 0
      %p57 = por %p55, %p56
      %p58 = scmp.ne.s32.totalorder %s47, %s50
      %p59 = scmp.eq.s32.totalorder %s21, 1
      %p60 = por %p58, %p59
      %p61 = scmp.ne.s32.totalorder %s50, %s51
      %p62 = scmp.eq.s32.totalorder %s21, 0
      %p63 = por %p61, %p62
      %p64 = scmp.ne.s32.totalorder %s50, %s51
      %p65 = scmp.eq.s32.totalorder %s22, 1
      %p66 = por %p64, %p65
      %p68 = scmp.ne.s32.totalorder %s51, %s67
      %p69 = scmp.eq.s32.totalorder %s22, 0
      %p70 = por %p68, %p69
      %p71 = scmp.le.s32.totalorder 1, %s16
      %p72 = scmp.lt.s32.totalorder %s16, 3
      %p73 = pnand %p71, %p72
      %p74 = pneg %p73
      // Predicated region
      $region9: #{tpu_custom_call.1} parent=5 // pred_check
        _
      $region10: #{tpu_custom_call.1} parent=5 // pred_check_branch
        %76 = sbr.rel (%p73) target = $region12
      $region11: #{tpu_custom_call.1} parent=5 // pred_region
        %s77 = ssub.s32 %s16, 1
        // Predicated region
        $region13: #{tpu_custom_call.1} parent=11 // pred_check
          %p78 = pneg %p37
        $region14: #{tpu_custom_call.1} parent=11 // pred_check_branch
          %80 = sbr.rel (%p78) target = $region16
        $region15: #{tpu_custom_call.1} parent=11 // pred_region
          %s82 = ssub.s32 8192, 8192
          %83 = vsyncadd [#allocation5], %s82
          %s84 = sshll.u32 [#allocation4], 4
          %s85 = int_to_ptr.vmem [resolvable:$true] %s84
          %90 = dma.hbm_to_vmem [thread:$0]  %s1, 8192, %s85, [#allocation5], 128, 128, 8
        $region16: #{tpu_custom_call.1} parent=11 // pred_fallthru
          _
      $region12: #{tpu_custom_call.1} parent=5 // pred_fallthru
        _
      %p91 = scmp.lt.s32.totalorder %s16, 2
      // Predicated region
      $region17: #{tpu_custom_call.1} parent=5 // pred_check
        %p92 = pneg %p91
      $region18: #{tpu_custom_call.1} parent=5 // pred_check_branch
        %94 = sbr.rel (%p92) target = $region20
      $region19: #{tpu_custom_call.1} parent=5 // pred_region
        _
      $region20: #{tpu_custom_call.1} parent=5 // pred_fallthru
        _
      %p95 = scmp.le.s32.totalorder 1, %s16
      %p96 = scmp.lt.s32.totalorder %s16, 3
      %p97 = pnand %p95, %p96
      %p98 = pneg %p97
      // Predicated region
      $region21: #{tpu_custom_call.1} parent=5 // pred_check
        _
      $region22: #{tpu_custom_call.1} parent=5 // pred_check_branch
        %100 = sbr.rel (%p97) target = $region24
      $region23: #{tpu_custom_call.1} parent=5 // pred_region
        %s101 = ssub.s32 %s16, 1
        // Predicated region
        $region25: #{tpu_custom_call.1} parent=23 // pred_check
          %p102 = pneg %p37
        $region26: #{tpu_custom_call.1} parent=23 // pred_check_branch
          %104 = sbr.rel (%p102) target = $region28
        $region27: #{tpu_custom_call.1} parent=23 // pred_region
          %105 = dma.done [#allocation5], 8192
        $region28: #{tpu_custom_call.1} parent=23 // pred_fallthru
          _
        %p106 = pneg %p37
        %p107 = pneg %p34
        %p108 = pneg %p63
        %p109 = pneg %p60
        %s110 = sand.u32 %s50, 1
        %s111 = scalar_lea.sflag [#allocation6], %s110
        %s112 = sand.u32 %s50, 1
        %s113 = smul.addr %s112, 8
        %s114 = scalar_lea.vmem [#allocation7], %s113
        %s115 = smul.u32 %s21, 8
        %s116 = sld [smem:[#allocation3 + %s115]]
        %s117 = scalar_lea.vmem [#allocation4], %s116
        %v118 = vld [vmem:[%s117] sm:$0x1]
        %119 = vst [vmem:[%s114] sm:$0x1] %v118
        %s120 = sadd.s32 %s115, 1
        %s121 = sld [smem:[#allocation3 + %s120]]
        %s122 = scalar_lea.vmem [#allocation4], %s121
        %v123 = vld [vmem:[%s122] sm:$0x1]
        %124 = vst [vmem:[%s114 + $0x1] sm:$0x1] %v123
        %s125 = sadd.s32 %s115, 2
        %s126 = sld [smem:[#allocation3 + %s125]]
        %s127 = scalar_lea.vmem [#allocation4], %s126
        %v128 = vld [vmem:[%s127] sm:$0x1]
        %129 = vst [vmem:[%s114 + $0x2] sm:$0x1] %v128
        %s130 = sadd.s32 %s115, 3
        %s131 = sld [smem:[#allocation3 + %s130]]
        %s132 = scalar_lea.vmem [#allocation4], %s131
        %v133 = vld [vmem:[%s132] sm:$0x1]
        %134 = vst [vmem:[%s114 + $0x3] sm:$0x1] %v133
        %s135 = sadd.s32 %s115, 4
        %s136 = sld [smem:[#allocation3 + %s135]]
        %s137 = scalar_lea.vmem [#allocation4], %s136
        %v138 = vld [vmem:[%s137] sm:$0x1]
        %139 = vst [vmem:[%s114 + $0x4] sm:$0x1] %v138
        %s140 = sadd.s32 %s115, 5
        %s141 = sld [smem:[#allocation3 + %s140]]
        %s142 = scalar_lea.vmem [#allocation4], %s141
        %v143 = vld [vmem:[%s142] sm:$0x1]
        %144 = vst [vmem:[%s114 + $0x5] sm:$0x1] %v143
        %s145 = sadd.s32 %s115, 6
        %s146 = sld [smem:[#allocation3 + %s145]]
        %s147 = scalar_lea.vmem [#allocation4], %s146
        %v148 = vld [vmem:[%s147] sm:$0x1]
        %149 = vst [vmem:[%s114 + $0x6] sm:$0x1] %v148
        %s150 = sadd.s32 %s115, 7
        %s151 = sld [smem:[#allocation3 + %s150]]
        %s152 = scalar_lea.vmem [#allocation4], %s151
        %v153 = vld [vmem:[%s152] sm:$0x1]
        %154 = vst [vmem:[%s114 + $0x7] sm:$0x1] %v153
        %s155 = sand.u32 %s50, 1
        %s156 = scalar_lea.sflag [#allocation6], %s155
        %s157 = sand.u32 %s50, 1
        %s158 = smul.addr %s157, 8
        %s159 = scalar_lea.vmem [#allocation7], %s158
        // Predicated region
        $region29: #{tpu_custom_call.1} parent=23 // pred_check
          %p160 = pneg %p60
        $region30: #{tpu_custom_call.1} parent=23 // pred_check_branch
          %162 = sbr.rel (%p160) target = $region32
        $region31: #{tpu_custom_call.1} parent=23 // pred_region
          %s164 = ssub.s32 128, 128
          %165 = vsyncadd %s156, %s164
          %s166 = smul.addr %s21, 128
          %s167 = scalar_lea.hbm %s2, %s166
          %s169 = sshll.u32 %s159, 4
          %s170 = int_to_ptr.vmem [resolvable:$true] %s169
          %172 = dma.vmem_to_hbm [thread:$0]  %s170, 128, %s167, %s156
        $region32: #{tpu_custom_call.1} parent=23 // pred_fallthru
          _
      $region24: #{tpu_custom_call.1} parent=5 // pred_fallthru
        _
      %p173 = scmp.le.s32.totalorder 2, %s16
      // Predicated region
      $region33: #{tpu_custom_call.1} parent=5 // pred_check
        %p174 = pneg %p173
      $region34: #{tpu_custom_call.1} parent=5 // pred_check_branch
        %176 = sbr.rel (%p174) target = $region36
      $region35: #{tpu_custom_call.1} parent=5 // pred_region
        %s177 = ssub.s32 %s16, 2
        // Predicated region
        $region37: #{tpu_custom_call.1} parent=35 // pred_check
          %p178 = pneg %p66
        $region38: #{tpu_custom_call.1} parent=35 // pred_check_branch
          %180 = sbr.rel (%p178) target = $region40
        $region39: #{tpu_custom_call.1} parent=35 // pred_region
          %s181 = sand.u32 %s51, 1
          %s182 = scalar_lea.sflag [#allocation6], %s181
          %s183 = sand.u32 %s51, 1
          %s184 = smul.addr %s183, 8
          %s185 = scalar_lea.vmem [#allocation7], %s184
          %186 = dma.done %s182, 128
        $region40: #{tpu_custom_call.1} parent=35 // pred_fallthru
          _
      $region36: #{tpu_custom_call.1} parent=5 // pred_fallthru
        _
    $region6: #{tpu_custom_call.1} parent=1 // loop_footer
      %s20 = sadd.s32 1, %s16
    $region7: #{tpu_custom_call.1} parent=1 // loop_footer_branch
      %15 = sbr.rel target = $region3
    $region8: #{tpu_custom_call.1} parent=1 // loop_exit
      _
    %187 = vsyncpa [#allocation5], 1
    %s188 = scalar_lea.sflag [#allocation5], 1
    %189 = vsyncpa %s188, 1
    %190 = vsyncpa [#allocation6], 1
    %s191 = scalar_lea.sflag [#allocation6], 1
    %192 = vsyncpa %s191, 1

</llo_original>
